<compile_context>
chip_gen: v7x
topology: tpu7x:2x2x1
jax: 0.10.0
libtpu: 0.0.40
codegen_flags: <defaults>
</compile_context>

<pallas_src>
import functools

import jax
import jax.numpy as jnp
from jax.experimental import pallas as pl
from jax.experimental.pallas import tpu as pltpu


def _round_up(v, m):
    return ((v + m - 1) // m) * m


def _uniformity_kernel(ii_ref, jj_ref, xr_ref, xc_ref, sqr_ref, sqc_ref,
                       out_ref, acc_ref, *, t, n_true):
    k = pl.program_id(1)

    @pl.when(k == 0)
    def _init():
        acc_ref[...] = jnp.zeros_like(acc_ref)

    xr = xr_ref[0]                      # (TILE, Dp), input dtype (f32 or bf16)
    xc = xc_ref[0]                      # (TILE, Dp)
    sq_r = sqr_ref[0, 0]                # (TILE, 1)  f32 squared norms (rows)
    sq_c = sqc_ref[0, 0]                # (1, TILE)  f32 squared norms (cols)

    # Gram tile on the MXU; f32 accumulate, highest precision so the Gram trick
    # matches the direct pdist computation to ~f32 ulp.
    g = jax.lax.dot_general(
        xr, xc,
        dimension_numbers=(((1,), (1,)), ((), ())),
        preferred_element_type=jnp.float32,
        precision=jax.lax.Precision.HIGHEST,
    )

    # ||xi - xj||^2, clamped: cancellation can make it slightly negative.
    d2 = jnp.maximum(sq_r + sq_c - 2.0 * g, 0.0)
    e = jnp.exp(-t * d2)                # (TILE, TILE) f32, EUP

    is_diag = ii_ref[k] == jj_ref[k]

    @pl.when(jnp.logical_not(is_diag))
    def _offdiag_tile():
        # Strictly-above-diagonal tile: each (i, j) pair also stands in for the
        # mirrored (j, i) pair of the skipped lower tile -> weight 2.
        acc_ref[...] += 2.0 * e

    @pl.when(is_diag)
    def _diag_tile():
        rows = jax.lax.broadcasted_iota(jnp.int32, e.shape, 0)
        cols = jax.lax.broadcasted_iota(jnp.int32, e.shape, 1)
        acc_ref[...] += jnp.where(rows == cols, 0.0, e)

    @pl.when(k == pl.num_programs(1) - 1)
    def _finalize():
        total = jnp.sum(acc_ref[...])                       # one XLU collapse
        mean = total * (1.0 / float(n_true * (n_true - 1)))  # == pdist mean
        out_ref[0, :, :] = jnp.broadcast_to(jnp.log(mean), (8, 128))


def uniformity_loss(x, t=2.0, tile=256):
    """x: (N, 2, D) array (same layout as the PyTorch module). Returns (loss, 0)."""
    N, P, D = x.shape
    assert P == 2, "PoN sampling expects a positive/negative pair axis of size 2"
    assert N >= 2
    itemsize = jnp.dtype(x.dtype).itemsize

    # Lane-dense feature dim (zero padding keeps dot products / norms intact).
    d_pad = _round_up(max(D, 128), 128)
    # Sample-dim tile: multiple of 8 sublanes, capped by the requested tile.
    tile = _round_up(min(int(tile), _round_up(N, 8)), 8)
    n_pad = _round_up(N, tile)
    n_tiles = n_pad // tile
    n_tri = n_tiles * (n_tiles + 1) // 2

    # (N, 2, D) -> (2, N_pad, D_pad)
    xs = jnp.transpose(x, (1, 0, 2))
    xs = jnp.pad(xs, ((0, 0), (0, n_pad - N), (0, d_pad - D)))
    if n_pad > N:
        # "Far away" padding rows: distinct huge values in lane 0 make every
        # pair involving a padded row have d2 >= 1e8, so exp(-t*d2) underflows
        # to exactly 0 (padded diagonals are masked on diagonal tiles).
        pad_vals = 1e4 * (1.0 + jnp.arange(n_pad - N, dtype=jnp.float32))
        xs = xs.at[:, N:, 0].set(pad_vals.astype(xs.dtype))

    # Per-row squared norms, precomputed once in f32 (hoisted out of the kernel).
    sq = jnp.sum(xs.astype(jnp.float32) ** 2, axis=-1)        # (2, N_pad)
    sq_rows = sq.reshape(2, n_tiles, tile)[:, :, :, None]      # (2, T, tile, 1)
    sq_cols = sq.reshape(2, n_tiles, tile)[:, :, None, :]      # (2, T, 1, tile)

    # Upper-triangular tile-pair schedule (scalar-prefetched into SMEM).
    ii_list, jj_list = [], []
    for a in range(n_tiles):
        for b in range(a, n_tiles):
            ii_list.append(a)
            jj_list.append(b)
    ii_tab = jnp.asarray(ii_list, dtype=jnp.int32)
    jj_tab = jnp.asarray(jj_list, dtype=jnp.int32)

    kernel = functools.partial(_uniformity_kernel, t=float(t), n_true=int(N))

    # VMEM budget: 2 (x row/col) * 2 (pipeline bufs) * (tile, d_pad) blocks,
    # the (tile, tile) accumulator, small norm/output blocks, plus headroom.
    vmem_needed = (2 * 2 * tile * d_pad * itemsize
                   + tile * tile * 4
                   + 4 * 2 * tile * 4
                   + 2 * 8 * 128 * 4)
    vmem_limit = int(min(48 * 1024 * 1024,
                         max(16 * 1024 * 1024, 2 * vmem_needed)))

    flops = int(2 * n_tri * 2 * tile * tile * d_pad)          # MXU Gram tiles
    transcendentals = int(2 * n_tri * tile * tile)            # EUP exp
    bytes_accessed = int(2 * n_tri * (2 * tile * d_pad * itemsize + 2 * tile * 4)
                         + 2 * 8 * 128 * 4)

    out = pl.pallas_call(
        kernel,
        out_shape=jax.ShapeDtypeStruct((2, 8, 128), jnp.float32),
        grid_spec=pltpu.PrefetchScalarGridSpec(
            num_scalar_prefetch=2,
            grid=(2, n_tri),
            in_specs=[
                pl.BlockSpec((1, tile, d_pad),
                             lambda s, k, it, jt: (s, it[k], 0)),
                pl.BlockSpec((1, tile, d_pad),
                             lambda s, k, it, jt: (s, jt[k], 0)),
                pl.BlockSpec((1, 1, tile, 1),
                             lambda s, k, it, jt: (s, it[k], 0, 0)),
                pl.BlockSpec((1, 1, 1, tile),
                             lambda s, k, it, jt: (s, jt[k], 0, 0)),
            ],
            out_specs=pl.BlockSpec((1, 8, 128),
                                   lambda s, k, it, jt: (s, 0, 0)),
            scratch_shapes=[pltpu.VMEM((tile, tile), jnp.float32)],
        ),
        compiler_params=pltpu.CompilerParams(
            dimension_semantics=("parallel", "arbitrary"),
            vmem_limit_bytes=vmem_limit,
        ),
        cost_estimate=pl.CostEstimate(
            flops=flops,
            transcendentals=transcendentals,
            bytes_accessed=bytes_accessed,
        ),
    )(ii_tab, jj_tab, xs, xs, sq_rows, sq_cols)

    losses = out[:, 0, 0]
    # Matches the PyTorch module's `return (nloss, 0)`
    return 0.5 * (losses[0] + losses[1]), 0


def _reference(x, t=2.0):
    # Pure-JAX reference mirroring torch.pdist(...).pow(2).mul(-t).exp().mean().log()
    def slice_loss(v):
        v = v.astype(jnp.float32)
        n = v.shape[0]
        d2 = jnp.sum((v[:, None, :] - v[None, :, :]) ** 2, axis=-1)
        mask = 1.0 - jnp.eye(n, dtype=jnp.float32)
        s = jnp.sum(jnp.exp(-t * d2) * mask)
        return jnp.log(s / (n * (n - 1)))

    return 0.5 * (slice_loss(x[:, 0, :]) + slice_loss(x[:, 1, :]))


if __name__ == "__main__":
    key = jax.random.PRNGKey(0)

    # Small PoN batch: N samples, 2 views, D=32 features. L2-normalised
    # embeddings (the usual input of a uniformity loss) keep exp(-t*d2) well
    # away from underflow so the numerical check is meaningful.
    N, D = 44, 32
    x = jax.random.normal(key, (N, 2, D), dtype=jnp.float32)
    x = x / jnp.linalg.norm(x, axis=-1, keepdims=True)

    ref = jax.block_until_ready(_reference(x, t=2.0))

    # tile=16 exercises the triangular multi-tile path and row padding (44->48).
    loss, aux = uniformity_loss(x, t=2.0, tile=16)
    loss = jax.block_until_ready(loss)
    assert aux == 0
    assert jnp.allclose(loss, ref, rtol=1e-4, atol=1e-4), (loss, ref)

    # Default tile (single-tile-per-slice path).
    loss2, _ = uniformity_loss(x, t=2.0)
    loss2 = jax.block_until_ready(loss2)
    assert jnp.allclose(loss2, ref, rtol=1e-4, atol=1e-4), (loss2, ref)

    print("KERNEL_OK")
</pallas_src>

<mosaic_0001>
module attributes {stable_mosaic.version = 11 : i64} {
  func.func @_uniformity_kernel(%arg0: i32, %arg1: i32, %arg2: memref<6xi32, #tpu.memory_space<smem>>, %arg3: memref<6xi32, #tpu.memory_space<smem>>, %arg4: memref<1x16x128xf32, #tpu.memory_space<vmem>>, %arg5: memref<1x16x128xf32, #tpu.memory_space<vmem>>, %arg6: memref<1x1x16x1xf32, #tpu.memory_space<vmem>>, %arg7: memref<1x1x1x16xf32, #tpu.memory_space<vmem>>, %arg8: memref<1x8x128xf32, #tpu.memory_space<vmem>>, %arg9: memref<16x16xf32, #tpu.memory_space<vmem>>) attributes {dimension_semantics = [#tpu.dimension_semantics<parallel>, #tpu.dimension_semantics<arbitrary>], iteration_bounds = array<i64: 2, 6>, scalar_prefetch = 2 : i64, scratch_operands = 1 : i64, tpu.core_type = #tpu.core_type<tc>, window_params = [{transform_indices = @transform_0, window_bounds = array<i64: 1, 16, 128>}, {transform_indices = @transform_1, window_bounds = array<i64: 1, 16, 128>}, {transform_indices = @transform_2, window_bounds = array<i64: 1, 1, 16, 1>}, {transform_indices = @transform_3, window_bounds = array<i64: 1, 1, 1, 16>}, {transform_indices = @transform_4, window_bounds = array<i64: 1, 8, 128>}]} {
    %c0_i32 = arith.constant 0 : i32
    %0 = arith.cmpi eq, %arg1, %c0_i32 : i32
    %1 = arith.extui %0 : i1 to i32
    %c0_i32_0 = arith.constant 0 : i32
    %2 = arith.cmpi ne, %1, %c0_i32_0 : i32
    scf.if %2 {
      %cst_20 = arith.constant 0.000000e+00 : f32
      %36 = vector.broadcast %cst_20 : f32 to vector<16x16xf32>
      %c0_21 = arith.constant 0 : index
      %c0_22 = arith.constant 0 : index
      %37 = vector.load %arg9[%c0_21, %c0_22] : memref<16x16xf32, #tpu.memory_space<vmem>>, vector<16x16xf32>
      tpu.vector_store %arg9[%c0_21, %c0_22], %36 {strides = array<i32>} : memref<16x16xf32, #tpu.memory_space<vmem>>, vector<16x16xf32>,
    } else {
    }
    %c0 = arith.constant 0 : index
    %c0_1 = arith.constant 0 : index
    %c0_2 = arith.constant 0 : index
    %3 = vector.load %arg4[%c0, %c0_1, %c0_2] : memref<1x16x128xf32, #tpu.memory_space<vmem>>, vector<1x16x128xf32>
    %4 = vector.shape_cast %3 : vector<1x16x128xf32> to vector<16x128xf32>
    %c0_3 = arith.constant 0 : index
    %c0_4 = arith.constant 0 : index
    %c0_5 = arith.constant 0 : index
    %5 = vector.load %arg5[%c0_3, %c0_4, %c0_5] : memref<1x16x128xf32, #tpu.memory_space<vmem>>, vector<1x16x128xf32>
    %6 = vector.shape_cast %5 : vector<1x16x128xf32> to vector<16x128xf32>
    %c0_6 = arith.constant 0 : index
    %c0_7 = arith.constant 0 : index
    %c0_8 = arith.constant 0 : index
    %c0_9 = arith.constant 0 : index
    %7 = vector.load %arg6[%c0_6, %c0_7, %c0_8, %c0_9] : memref<1x1x16x1xf32, #tpu.memory_space<vmem>>, vector<1x1x16x1xf32>
    %8 = vector.shape_cast %7 : vector<1x1x16x1xf32> to vector<16x1xf32>
    %c0_10 = arith.constant 0 : index
    %c0_11 = arith.constant 0 : index
    %c0_12 = arith.constant 0 : index
    %c0_13 = arith.constant 0 : index
    %9 = vector.load %arg7[%c0_10, %c0_11, %c0_12, %c0_13] : memref<1x1x1x16xf32, #tpu.memory_space<vmem>>, vector<1x1x1x16xf32>
    %10 = vector.shape_cast %9 : vector<1x1x1x16xf32> to vector<1x16xf32>
    %cst = arith.constant dense<0.000000e+00> : vector<16x16xf32>
    %11 = tpu.matmul %4, %6, %cst {dimension_numbers = #tpu.dot_dimension_numbers<[1], [1], [0], [0], [0, 0, 1, 0], [], []>, precision = #tpu.contract_precision<fp32>} : vector<16x128xf32>, vector<16x128xf32>, vector<16x16xf32> -> vector<16x16xf32>
    %12 = vector.broadcast %8 : vector<16x1xf32> to vector<16x16xf32>
    %13 = vector.broadcast %10 : vector<1x16xf32> to vector<16x16xf32>
    %14 = arith.addf %12, %13 : vector<16x16xf32>
    %cst_14 = arith.constant 2.000000e+00 : f32
    %15 = vector.broadcast %cst_14 : f32 to vector<16x16xf32>
    %16 = arith.mulf %15, %11 : vector<16x16xf32>
    %17 = arith.subf %14, %16 : vector<16x16xf32>
    %cst_15 = arith.constant 0.000000e+00 : f32
    %18 = vector.broadcast %cst_15 : f32 to vector<16x16xf32>
    %19 = arith.maximumf %17, %18 : vector<16x16xf32>
    %cst_16 = arith.constant -2.000000e+00 : f32
    %20 = vector.broadcast %cst_16 : f32 to vector<16x16xf32>
    %21 = arith.mulf %20, %19 : vector<16x16xf32>
    %22 = math.exp %21 : vector<16x16xf32>
    %23 = arith.index_cast %arg1 : i32 to index
    %24 = memref.load %arg2[%23] : memref<6xi32, #tpu.memory_space<smem>>
    %25 = arith.index_cast %arg1 : i32 to index
    %26 = memref.load %arg3[%25] : memref<6xi32, #tpu.memory_space<smem>>
    %27 = arith.cmpi eq, %24, %26 : i32
    %true = arith.constant true
    %28 = arith.xori %27, %true : i1
    %29 = arith.extui %28 : i1 to i32
    %c0_i32_17 = arith.constant 0 : i32
    %30 = arith.cmpi ne, %29, %c0_i32_17 : i32
    scf.if %30 {
      %c0_20 = arith.constant 0 : index
      %c0_21 = arith.constant 0 : index
      %36 = vector.load %arg9[%c0_20, %c0_21] : memref<16x16xf32, #tpu.memory_space<vmem>>, vector<16x16xf32>
      %cst_22 = arith.constant 2.000000e+00 : f32
      %37 = vector.broadcast %cst_22 : f32 to vector<16x16xf32>
      %38 = arith.mulf %37, %22 : vector<16x16xf32>
      %39 = arith.addf %36, %38 : vector<16x16xf32>
      %c0_23 = arith.constant 0 : index
      %c0_24 = arith.constant 0 : index
      %40 = vector.load %arg9[%c0_23, %c0_24] : memref<16x16xf32, #tpu.memory_space<vmem>>, vector<16x16xf32>
      tpu.vector_store %arg9[%c0_23, %c0_24], %39 {strides = array<i32>} : memref<16x16xf32, #tpu.memory_space<vmem>>, vector<16x16xf32>,
    } else {
    }
    %31 = arith.extui %27 : i1 to i32
    %c0_i32_18 = arith.constant 0 : i32
    %32 = arith.cmpi ne, %31, %c0_i32_18 : i32
    scf.if %32 {
      %36 = tpu.iota {dimensions = array<i32: 0>} : vector<16x16xi32>
      %37 = tpu.iota {dimensions = array<i32: 1>} : vector<16x16xi32>
      %c0_20 = arith.constant 0 : index
      %c0_21 = arith.constant 0 : index
      %38 = vector.load %arg9[%c0_20, %c0_21] : memref<16x16xf32, #tpu.memory_space<vmem>>, vector<16x16xf32>
      %39 = arith.cmpi eq, %36, %37 : vector<16x16xi32>
      %cst_22 = arith.constant 0.000000e+00 : f32
      %40 = vector.broadcast %cst_22 : f32 to vector<16x16xf32>
      %41 = arith.select %39, %40, %22 : vector<16x16xi1>, vector<16x16xf32>
      %42 = arith.addf %38, %41 : vector<16x16xf32>
      %c0_23 = arith.constant 0 : index
      %c0_24 = arith.constant 0 : index
      %43 = vector.load %arg9[%c0_23, %c0_24] : memref<16x16xf32, #tpu.memory_space<vmem>>, vector<16x16xf32>
      tpu.vector_store %arg9[%c0_23, %c0_24], %42 {strides = array<i32>} : memref<16x16xf32, #tpu.memory_space<vmem>>, vector<16x16xf32>,
    } else {
    }
    %c5_i32 = arith.constant 5 : i32
    %33 = arith.cmpi eq, %arg1, %c5_i32 : i32
    %34 = arith.extui %33 : i1 to i32
    %c0_i32_19 = arith.constant 0 : i32
    %35 = arith.cmpi ne, %34, %c0_i32_19 : i32
    scf.if %35 {
      %c0_20 = arith.constant 0 : index
      %c0_21 = arith.constant 0 : index
      %36 = vector.load %arg9[%c0_20, %c0_21] : memref<16x16xf32, #tpu.memory_space<vmem>>, vector<16x16xf32>
      %37 = vector.shape_cast %36 : vector<16x16xf32> to vector<1x16x16xf32>
      %cst_22 = arith.constant dense<0.000000e+00> : vector<1xf32>
      %38 = vector.multi_reduction <add>, %37, %cst_22 [1, 2] : vector<1x16x16xf32> to vector<1xf32>
      %39 = vector.shape_cast %38 : vector<1xf32> to vector<1x1x1xf32>
      %40 = vector.extract %39[0, 0, 0] : f32 from vector<1x1x1xf32>
      %cst_23 = arith.constant 5.28541219E-4 : f32
      %41 = arith.mulf %40, %cst_23 : f32
      %42 = math.log %41 : f32
      %43 = vector.broadcast %42 : f32 to vector<8x128xf32>
      %c0_24 = arith.constant 0 : index
      %c0_25 = arith.constant 0 : index
      %c0_26 = arith.constant 0 : index
      %44 = vector.load %arg8[%c0_24, %c0_25, %c0_26] : memref<1x8x128xf32, #tpu.memory_space<vmem>>, vector<1x8x128xf32>
      %45 = vector.shape_cast %44 : vector<1x8x128xf32> to vector<8x128xf32>
      %46 = vector.shape_cast %43 : vector<8x128xf32> to vector<1x8x128xf32>
      tpu.vector_store %arg8[%c0_24, %c0_25, %c0_26], %46 {strides = array<i32>} : memref<1x8x128xf32, #tpu.memory_space<vmem>>, vector<1x8x128xf32>,
    } else {
    }
    return
  }
  func.func @transform_0(%arg0: i32, %arg1: i32, %arg2: memref<6xi32, #tpu.memory_space<smem>>, %arg3: memref<6xi32, #tpu.memory_space<smem>>) -> (i32, i32, i32) {
    %0 = arith.index_cast %arg1 : i32 to index
    %1 = memref.load %arg2[%0] : memref<6xi32, #tpu.memory_space<smem>>
    %c0_i32 = arith.constant 0 : i32
    %c0_i32_0 = arith.constant 0 : i32
    return %arg0, %1, %c0_i32 : i32, i32, i32
  }
  func.func @transform_1(%arg0: i32, %arg1: i32, %arg2: memref<6xi32, #tpu.memory_space<smem>>, %arg3: memref<6xi32, #tpu.memory_space<smem>>) -> (i32, i32, i32) {
    %0 = arith.index_cast %arg1 : i32 to index
    %1 = memref.load %arg3[%0] : memref<6xi32, #tpu.memory_space<smem>>
    %c0_i32 = arith.constant 0 : i32
    %c0_i32_0 = arith.constant 0 : i32
    return %arg0, %1, %c0_i32 : i32, i32, i32
  }
  func.func @transform_2(%arg0: i32, %arg1: i32, %arg2: memref<6xi32, #tpu.memory_space<smem>>, %arg3: memref<6xi32, #tpu.memory_space<smem>>) -> (i32, i32, i32, i32) {
    %0 = arith.index_cast %arg1 : i32 to index
    %1 = memref.load %arg2[%0] : memref<6xi32, #tpu.memory_space<smem>>
    %c0_i32 = arith.constant 0 : i32
    %c0_i32_0 = arith.constant 0 : i32
    %c0_i32_1 = arith.constant 0 : i32
    return %arg0, %1, %c0_i32, %c0_i32_0 : i32, i32, i32, i32
  }
  func.func @transform_3(%arg0: i32, %arg1: i32, %arg2: memref<6xi32, #tpu.memory_space<smem>>, %arg3: memref<6xi32, #tpu.memory_space<smem>>) -> (i32, i32, i32, i32) {
    %0 = arith.index_cast %arg1 : i32 to index
    %1 = memref.load %arg3[%0] : memref<6xi32, #tpu.memory_space<smem>>
    %c0_i32 = arith.constant 0 : i32
    %c0_i32_0 = arith.constant 0 : i32
    %c0_i32_1 = arith.constant 0 : i32
    return %arg0, %1, %c0_i32, %c0_i32_0 : i32, i32, i32, i32
  }
  func.func @transform_4(%arg0: i32, %arg1: i32, %arg2: memref<6xi32, #tpu.memory_space<smem>>, %arg3: memref<6xi32, #tpu.memory_space<smem>>) -> (i32, i32, i32) {
    %c0_i32 = arith.constant 0 : i32
    %c0_i32_0 = arith.constant 0 : i32
    %c0_i32_1 = arith.constant 0 : i32
    return %arg0, %c0_i32, %c0_i32_0 : i32, i32, i32
  }
}

</mosaic_0001>

<llo_original>
// kernel: tpu_custom_call.1
$region0: #{tpu_custom_call.1}
  #allocation0 [shape = 'u32[]', space=smem, size = 0x4, offset = 0x4, fixed_abs, tag = 'smem constant byte address 0x4 - core index']
  #allocation1 [shape = 'u32[144,128]{1,0:T(1,128)}', space=vmem, size = 0x12000, scoped, tag = 'internal scratch']
  #allocation2 [shape = 'f32[16,16]{1,0:T(8,128)}', space=vmem, size = 0x2000, scoped, tag = 'scratch operand']
  #allocation3 [shape = 's32[1]{0}', space=sflag, size = 0x4, scoped, tag = 'scoped memory for tpu_custom_call.1']
  #allocation4 [shape = 'u8[512]{0}', space=smem, size = 0x200, scoped, tag = 'prefetched SMEM operand 0']
  #allocation5 [shape = 'u8[512]{0}', space=smem, size = 0x200, scoped, tag = 'prefetched SMEM operand 1']
  %s0 = inlined_call_operand.vmem [shape: s32[6], index: 0, kind: input, shape index: {}]
  %s1 = inlined_call_operand.vmem [shape: s32[6], index: 1, kind: input, shape index: {}]
  %s2 = inlined_call_operand.vmem [shape: f32[2,48,128], index: 2, kind: input, shape index: {}]
  %s3 = inlined_call_operand.hbm [shape: f32[2,48,128], index: 3, kind: input, shape index: {}]
  %s4 = inlined_call_operand.vmem [shape: f32[2,3,16,1], index: 4, kind: input, shape index: {}]
  %s5 = inlined_call_operand.vmem [shape: f32[2,3,1,16], index: 5, kind: input, shape index: {}]
  %s6 = inlined_call_operand.hbm [shape: f32[2,8,128], index: 6, kind: output, shape index: {}]
  %s7 = sld [smem:[#allocation0]]
  $region69: #{tpu_custom_call.1} parent=0
    _
  %s9 = ssub.s32 1, %s7
  %s10 = scalar_select 0, %s9, %s7
  %s11 = sshll.u32 %s0, 4
  %s12 = int_to_ptr.vmem [resolvable:$true] %s11
  %14 = dma.vmem_to_smem %s12, 16, [#allocation4], [#allocation3]
  %s15 = sshll.u32 %s1, 4
  %s16 = int_to_ptr.vmem [resolvable:$true] %s15
  %18 = dma.vmem_to_smem %s16, 16, [#allocation5], [#allocation3]
  %19 = dma.done [#allocation3], 32
  %20 = sfence
  $region1: #{tpu_custom_call.1} parent=0
    #allocation6 [shape = 'u8[16384]{0}', space=vmem, size = 0x4000, scoped, tag = 'input window, operand 3']
    #allocation7 [shape = 's32[2]{0}', space=sflag, size = 0x8, scoped, tag = 'scoped memory for tpu_custom_call.1']
    #allocation8 [shape = 's32[2]{0}', space=sflag, size = 0x8, scoped, tag = 'scoped memory for tpu_custom_call.1']
    #allocation9 [shape = 'u8[8192]{0}', space=vmem, size = 0x2000, scoped, tag = 'output window, operand 0']
    %21 = vsyncpa [#allocation7], 0
    %s22 = scalar_lea.sflag [#allocation7], 1
    %23 = vsyncpa %s22, 0
    %24 = vsyncpa [#allocation8], 0
    %s25 = scalar_lea.sflag [#allocation8], 1
    %26 = vsyncpa %s25, 0
    loop: start=0, step=1, limit=14
    $region2: #{tpu_custom_call.1} parent=1 // loop_pre_header
      _
    $region3: #{tpu_custom_call.1} parent=1 // loop_header
      %s28 = sphi 0, %s32
      %p29 = scmp.ge.s32.totalorder %s28, 14
      %s35 = sphi 0, %s47
      %s36 = sphi 0, %s43
      %s37 = sphi 0, %s35
      %s38 = sphi 0, %s36
      %s39 = sphi 0, %s37
      %s40 = sphi 0, %s38
      %s54 = sphi 0, %s56
      %s57 = sphi 0, %s54
      %s58 = sphi 0, %s57
      %s74 = sphi 0, %s58
      %s84 = sphi 0, %s86
      %s87 = sphi 0, %s84
      %s88 = sphi 0, %s87
      %s104 = sphi 0, %s88
      %s114 = sphi 0, %s116
      %s117 = sphi 0, %s114
      %s118 = sphi 0, %s117
      %s134 = sphi 0, %s118
      %s144 = sphi 0, %s146
      %s147 = sphi 0, %s144
      %s148 = sphi 0, %s147
      %s164 = sphi 0, %s148
      %s170 = sphi 0, %s172
      %s173 = sphi 0, %s170
      %s174 = sphi 0, %s173
      %s190 = sphi 0, %s174
    $region4: #{tpu_custom_call.1} parent=1 // loop_header_branch
      %31 = sbr.rel (%p29) target = $region8
    $region5: #{tpu_custom_call.1} parent=1 // loop_body
      %s33 = ssub.s32 %s28, 1
      %s34 = ssub.s32 %s28, 2
      %s41 = sadd.s32 1, %s36
      %p42 = scmp.ge.s32.totalorder %s41, 6
      %s43 = scalar_select %p42, 0, %s41
      %s44 = sadd.s32 1, %s35
      %s45 = scalar_select %p42, %s44, %s35
      %p46 = scmp.ge.s32.totalorder %s45, 2
      %s47 = scalar_select %p46, 0, %s45
      %s48 = sld [smem:[#allocation4 + %s36]]
      %s49 = sld [smem:[#allocation4 + %s43]]
      %s50 = ssub.s32 %s35, %s47
      %s51 = ssub.s32 %s48, %s49
      %s52 = sor.u32 %s50, %s51
      %p53 = scmp.eq.s32.totalorder %s52, 0
      %s55 = sadd.s32 %s54, 1
      %s56 = scalar_select %p53, %s54, %s55
      %p59 = pneg %p53
      %p60 = scmp.eq.s32.totalorder %s28, 11
      %p61 = por %p59, %p60
      %p62 = scmp.ne.s32.totalorder %s54, %s57
      %p63 = scmp.eq.s32.totalorder %s28, 0
      %p64 = por %p62, %p63
      %p65 = scmp.ne.s32.totalorder %s54, %s57
      %p66 = scmp.eq.s32.totalorder %s33, 11
      %p67 = por %p65, %p66
      %p68 = scmp.ne.s32.totalorder %s57, %s58
      %p69 = scmp.eq.s32.totalorder %s33, 0
      %p70 = por %p68, %p69
      %p71 = scmp.ne.s32.totalorder %s57, %s58
      %p72 = scmp.eq.s32.totalorder %s34, 11
      %p73 = por %p71, %p72
      %p75 = scmp.ne.s32.totalorder %s58, %s74
      %p76 = scmp.eq.s32.totalorder %s34, 0
      %p77 = por %p75, %p76
      %s78 = sld [smem:[#allocation5 + %s36]]
      %s79 = sld [smem:[#allocation5 + %s43]]
      %s80 = ssub.s32 %s35, %s47
      %s81 = ssub.s32 %s78, %s79
      %s82 = sor.u32 %s80, %s81
      %p83 = scmp.eq.s32.totalorder %s82, 0
      %s85 = sadd.s32 %s84, 1
      %s86 = scalar_select %p83, %s84, %s85
      %p89 = pneg %p83
      %p90 = scmp.eq.s32.totalorder %s28, 11
      %p91 = por %p89, %p90
      %p92 = scmp.ne.s32.totalorder %s84, %s87
      %p93 = scmp.eq.s32.totalorder %s28, 0
      %p94 = por %p92, %p93
      %p95 = scmp.ne.s32.totalorder %s84, %s87
      %p96 = scmp.eq.s32.totalorder %s33, 11
      %p97 = por %p95, %p96
      %p98 = scmp.ne.s32.totalorder %s87, %s88
      %p99 = scmp.eq.s32.totalorder %s33, 0
      %p100 = por %p98, %p99
      %p101 = scmp.ne.s32.totalorder %s87, %s88
      %p102 = scmp.eq.s32.totalorder %s34, 11
      %p103 = por %p101, %p102
      %p105 = scmp.ne.s32.totalorder %s88, %s104
      %p106 = scmp.eq.s32.totalorder %s34, 0
      %p107 = por %p105, %p106
      %s108 = sld [smem:[#allocation4 + %s36]]
      %s109 = sld [smem:[#allocation4 + %s43]]
      %s110 = ssub.s32 %s35, %s47
      %s111 = ssub.s32 %s108, %s109
      %s112 = sor.u32 %s110, %s111
      %p113 = scmp.eq.s32.totalorder %s112, 0
      %s115 = sadd.s32 %s114, 1
      %s116 = scalar_select %p113, %s114, %s115
      %p119 = pneg %p113
      %p120 = scmp.eq.s32.totalorder %s28, 11
      %p121 = por %p119, %p120
      %p122 = scmp.ne.s32.totalorder %s114, %s117
      %p123 = scmp.eq.s32.totalorder %s28, 0
      %p124 = por %p122, %p123
      %p125 = scmp.ne.s32.totalorder %s114, %s117
      %p126 = scmp.eq.s32.totalorder %s33, 11
      %p127 = por %p125, %p126
      %p128 = scmp.ne.s32.totalorder %s117, %s118
      %p129 = scmp.eq.s32.totalorder %s33, 0
      %p130 = por %p128, %p129
      %p131 = scmp.ne.s32.totalorder %s117, %s118
      %p132 = scmp.eq.s32.totalorder %s34, 11
      %p133 = por %p131, %p132
      %p135 = scmp.ne.s32.totalorder %s118, %s134
      %p136 = scmp.eq.s32.totalorder %s34, 0
      %p137 = por %p135, %p136
      %s138 = sld [smem:[#allocation5 + %s36]]
      %s139 = sld [smem:[#allocation5 + %s43]]
      %s140 = ssub.s32 %s35, %s47
      %s141 = ssub.s32 %s138, %s139
      %s142 = sor.u32 %s140, %s141
      %p143 = scmp.eq.s32.totalorder %s142, 0
      %s145 = sadd.s32 %s144, 1
      %s146 = scalar_select %p143, %s144, %s145
      %p149 = pneg %p143
      %p150 = scmp.eq.s32.totalorder %s28, 11
      %p151 = por %p149, %p150
      %p152 = scmp.ne.s32.totalorder %s144, %s147
      %p153 = scmp.eq.s32.totalorder %s28, 0
      %p154 = por %p152, %p153
      %p155 = scmp.ne.s32.totalorder %s144, %s147
      %p156 = scmp.eq.s32.totalorder %s33, 11
      %p157 = por %p155, %p156
      %p158 = scmp.ne.s32.totalorder %s147, %s148
      %p159 = scmp.eq.s32.totalorder %s33, 0
      %p160 = por %p158, %p159
      %p161 = scmp.ne.s32.totalorder %s147, %s148
      %p162 = scmp.eq.s32.totalorder %s34, 11
      %p163 = por %p161, %p162
      %p165 = scmp.ne.s32.totalorder %s148, %s164
      %p166 = scmp.eq.s32.totalorder %s34, 0
      %p167 = por %p165, %p166
      %s168 = ssub.s32 %s35, %s47
      %p169 = scmp.eq.s32.totalorder %s168, 0
      %s171 = sadd.s32 %s170, 1
      %s172 = scalar_select %p169, %s170, %s171
      %p175 = pneg %p169
      %p176 = scmp.eq.s32.totalorder %s28, 11
      %p177 = por %p175, %p176
      %p178 = scmp.ne.s32.totalorder %s170, %s173
      %p179 = scmp.eq.s32.totalorder %s28, 0
      %p180 = por %p178, %p179
      %p181 = scmp.ne.s32.totalorder %s170, %s173
      %p182 = scmp.eq.s32.totalorder %s33, 11
      %p183 = por %p181, %p182
      %p184 = scmp.ne.s32.totalorder %s173, %s174
      %p185 = scmp.eq.s32.totalorder %s33, 0
      %p186 = por %p184, %p185
      %p187 = scmp.ne.s32.totalorder %s173, %s174
      %p188 = scmp.eq.s32.totalorder %s34, 11
      %p189 = por %p187, %p188
      %p191 = scmp.ne.s32.totalorder %s174, %s190
      %p192 = scmp.eq.s32.totalorder %s34, 0
      %p193 = por %p191, %p192
      %p194 = scmp.le.s32.totalorder 1, %s28
      %p195 = scmp.lt.s32.totalorder %s28, 13
      %p196 = pnand %p194, %p195
      %p197 = pneg %p196
      // Predicated region
      $region9: #{tpu_custom_call.1} parent=5 // pred_check
        _
      $region10: #{tpu_custom_call.1} parent=5 // pred_check_branch
        %199 = sbr.rel (%p196) target = $region12
      $region11: #{tpu_custom_call.1} parent=5 // pred_region
        %s200 = ssub.s32 %s28, 1
      $region12: #{tpu_custom_call.1} parent=5 // pred_fallthru
        _
      %p201 = scmp.lt.s32.totalorder %s28, 12
      // Predicated region
      $region13: #{tpu_custom_call.1} parent=5 // pred_check
        %p202 = pneg %p201
      $region14: #{tpu_custom_call.1} parent=5 // pred_check_branch
        %204 = sbr.rel (%p202) target = $region16
      $region15: #{tpu_custom_call.1} parent=5 // pred_region
        // Predicated region
        $region17: #{tpu_custom_call.1} parent=15 // pred_check
          %p205 = pneg %p64
        $region18: #{tpu_custom_call.1} parent=15 // pred_check_branch
          %207 = sbr.rel (%p205) target = $region20
        $region19: #{tpu_custom_call.1} parent=15 // pred_region
          %s208 = sld [smem:[#allocation4 + %s36]]
          %s209 = smul.u32 2, %s208
          %p210 = scmp.lt.s32.totalorder %s35, 1
          %s211 = scalar_select %p210, %s35, 1
          %p212 = scmp.lt.s32.totalorder %s209, 5
          %s213 = scalar_select %p212, %s209, 5
          %s214 = smul.addr %s211, 6
          %s215 = sadd.s32 %s213, %s214
          %s216 = smul.addr %s215, 8
          %s217 = scalar_lea.vmem %s2, %s216
          %s218 = sld [smem:[#allocation4 + %s36]]
          %s219 = smul.u32 2, %s218
        $region20: #{tpu_custom_call.1} parent=15 // pred_fallthru
          _
        // Predicated region
        $region21: #{tpu_custom_call.1} parent=15 // pred_check
          %p220 = pneg %p94
        $region22: #{tpu_custom_call.1} parent=15 // pred_check_branch
          %222 = sbr.rel (%p220) target = $region24
        $region23: #{tpu_custom_call.1} parent=15 // pred_region
          %s223 = sand.u32 %s84, 1
          %s224 = scalar_lea.sflag [#allocation7], %s223
          %s225 = sand.u32 %s84, 1
          %s226 = smul.addr %s225, 16
          %s227 = scalar_lea.vmem [#allocation6], %s226
          %s228 = sld [smem:[#allocation5 + %s36]]
          %s229 = smul.u32 2, %s228
          %s231 = ssub.s32 256, 256
          %232 = vsyncadd %s224, %s231
          %s233 = smul.addr %s35, 6
          %s234 = sadd.s32 %s229, %s233
          %s235 = smul.addr %s234, 128
          %s236 = scalar_lea.hbm %s3, %s235
          %s237 = sshll.u32 %s227, 4
          %s238 = int_to_ptr.vmem [resolvable:$true] %s237
          %243 = dma.hbm_to_vmem [thread:$0]  %s236, 256, %s238, %s224, 128, 128, 8
        $region24: #{tpu_custom_call.1} parent=15 // pred_fallthru
          _
        // Predicated region
        $region25: #{tpu_custom_call.1} parent=15 // pred_check
          %p244 = pneg %p124
        $region26: #{tpu_custom_call.1} parent=15 // pred_check_branch
          %246 = sbr.rel (%p244) target = $region28
        $region27: #{tpu_custom_call.1} parent=15 // pred_region
          %s247 = sld [smem:[#allocation4 + %s36]]
          %p248 = scmp.lt.s32.totalorder %s35, 1
          %s249 = scalar_select %p248, %s35, 1
          %p250 = scmp.lt.s32.totalorder %s247, 2
          %s251 = scalar_select %p250, %s247, 2
          %s252 = smul.addr %s251, 2
          %s253 = smul.addr %s249, 6
          %s254 = sadd.s32 %s252, %s253
          %s255 = smul.addr %s254, 8
          %s256 = scalar_lea.vmem %s4, %s255
          %s257 = sld [smem:[#allocation4 + %s36]]
        $region28: #{tpu_custom_call.1} parent=15 // pred_fallthru
          _
        // Predicated region
        $region29: #{tpu_custom_call.1} parent=15 // pred_check
          %p258 = pneg %p154
        $region30: #{tpu_custom_call.1} parent=15 // pred_check_branch
          %260 = sbr.rel (%p258) target = $region32
        $region31: #{tpu_custom_call.1} parent=15 // pred_region
          %s261 = sld [smem:[#allocation5 + %s36]]
          %p262 = scmp.lt.s32.totalorder %s35, 1
          %s263 = scalar_select %p262, %s35, 1
          %p264 = scmp.lt.s32.totalorder %s261, 2
          %s265 = scalar_select %p264, %s261, 2
          %s266 = smul.addr %s263, 3
          %s267 = sadd.s32 %s265, %s266
          %s268 = scalar_lea.vmem %s5, %s267
          %s269 = sld [smem:[#allocation5 + %s36]]
        $region32: #{tpu_custom_call.1} parent=15 // pred_fallthru
          _
      $region16: #{tpu_custom_call.1} parent=5 // pred_fallthru
        _
      %p270 = scmp.le.s32.totalorder 1, %s28
      %p271 = scmp.lt.s32.totalorder %s28, 13
      %p272 = pnand %p270, %p271
      %p273 = pneg %p272
      // Predicated region
      $region33: #{tpu_custom_call.1} parent=5 // pred_check
        _
      $region34: #{tpu_custom_call.1} parent=5 // pred_check_branch
        %275 = sbr.rel (%p272) target = $region36
      $region35: #{tpu_custom_call.1} parent=5 // pred_region
        %s276 = ssub.s32 %s28, 1
        %s277 = sand.u32 %s87, 1
        %s278 = scalar_lea.sflag [#allocation7], %s277
        %s279 = sand.u32 %s87, 1
        %s280 = smul.addr %s279, 16
        %s281 = scalar_lea.vmem [#allocation6], %s280
        // Predicated region
        $region37: #{tpu_custom_call.1} parent=35 // pred_check
          %p282 = pneg %p100
        $region38: #{tpu_custom_call.1} parent=35 // pred_check_branch
          %284 = sbr.rel (%p282) target = $region40
        $region39: #{tpu_custom_call.1} parent=35 // pred_region
          %285 = dma.done %s278, 256
        $region40: #{tpu_custom_call.1} parent=35 // pred_fallthru
          _
        %s286 = sld [smem:[#allocation4 + %s38]]
        %s287 = smul.u32 2, %s286
        %p288 = scmp.lt.s32.totalorder %s37, 1
        %s289 = scalar_select %p288, %s37, 1
        %p290 = scmp.lt.s32.totalorder %s287, 5
        %s291 = scalar_select %p290, %s287, 5
        %s292 = smul.addr %s289, 6
        %s293 = sadd.s32 %s291, %s292
        %s294 = smul.addr %s293, 8
        %s295 = scalar_lea.vmem %s2, %s294
        %p296 = pneg %p70
        %p297 = pneg %p67
        %s298 = sand.u32 %s87, 1
        %s299 = scalar_lea.sflag [#allocation7], %s298
        %s300 = sand.u32 %s87, 1
        %s301 = smul.addr %s300, 16
        %s302 = scalar_lea.vmem [#allocation6], %s301
        %p303 = pneg %p100
        %p304 = pneg %p97
        %s305 = sld [smem:[#allocation4 + %s38]]
        %p306 = scmp.lt.s32.totalorder %s37, 1
        %s307 = scalar_select %p306, %s37, 1
        %p308 = scmp.lt.s32.totalorder %s305, 2
        %s309 = scalar_select %p308, %s305, 2
        %s310 = smul.addr %s309, 2
        %s311 = smul.addr %s307, 6
        %s312 = sadd.s32 %s310, %s311
        %s313 = smul.addr %s312, 8
        %s314 = scalar_lea.vmem %s4, %s313
        %p315 = pneg %p130
        %p316 = pneg %p127
        %s317 = sld [smem:[#allocation5 + %s38]]
        %p318 = scmp.lt.s32.totalorder %s37, 1
        %s319 = scalar_select %p318, %s37, 1
        %p320 = scmp.lt.s32.totalorder %s317, 2
        %s321 = scalar_select %p320, %s317, 2
        %s322 = smul.addr %s319, 3
        %s323 = sadd.s32 %s321, %s322
        %s324 = scalar_lea.vmem %s5, %s323
        %p325 = pneg %p160
        %p326 = pneg %p157
        %p327 = pneg %p186
        %p328 = pneg %p183
        %s329 = sand.u32 %s173, 1
        %s330 = scalar_lea.sflag [#allocation8], %s329
        %s331 = sand.u32 %s173, 1
        %s332 = smul.addr %s331, 8
        %s333 = scalar_lea.vmem [#allocation9], %s332
        %s334 = sld [smem:[#allocation4 + %s38]]
        %s335 = smul.u32 2, %s334
        %p336 = scmp.lt.s32.totalorder %s37, 1
        %s337 = scalar_select %p336, %s37, 1
        %p338 = scmp.lt.s32.totalorder %s335, 5
        %s339 = scalar_select %p338, %s335, 5
        %s340 = smul.addr %s337, 6
        %s341 = sadd.s32 %s339, %s340
        %s342 = smul.addr %s341, 8
        %s343 = scalar_lea.vmem %s2, %s342
        %s344 = sld [smem:[#allocation4 + %s38]]
        %s345 = smul.u32 2, %s344
        %s346 = sld [smem:[#allocation5 + %s38]]
        %s347 = smul.u32 2, %s346
        %s348 = sld [smem:[#allocation4 + %s38]]
        %p349 = scmp.lt.s32.totalorder %s37, 1
        %s350 = scalar_select %p349, %s37, 1
        %p351 = scmp.lt.s32.totalorder %s348, 2
        %s352 = scalar_select %p351, %s348, 2
        %s353 = smul.addr %s352, 2
        %s354 = smul.addr %s350, 6
        %s355 = sadd.s32 %s353, %s354
        %s356 = smul.addr %s355, 8
        %s357 = scalar_lea.vmem %s4, %s356
        %s358 = sld [smem:[#allocation4 + %s38]]
        %s359 = sld [smem:[#allocation5 + %s38]]
        %p360 = scmp.lt.s32.totalorder %s37, 1
        %s361 = scalar_select %p360, %s37, 1
        %p362 = scmp.lt.s32.totalorder %s359, 2
        %s363 = scalar_select %p362, %s359, 2
        %s364 = smul.addr %s361, 3
        %s365 = sadd.s32 %s363, %s364
        %s366 = scalar_lea.vmem %s5, %s365
        %s367 = sld [smem:[#allocation5 + %s38]]
        %p368 = scmp.eq.s32.totalorder %s38, 0
        // Predicated region
        $region41: #{tpu_custom_call.1} parent=35 // pred_check
          %p369 = pneg %p368
        $region42: #{tpu_custom_call.1} parent=35 // pred_check_branch
          %371 = sbr.rel (%p369) target = $region44
        $region43: #{tpu_custom_call.1} parent=35 // pred_region
          %vm372 = vcmask 130048
          %373 = vst.msk [vmem:[#allocation2] sm:$0xff] %vm372, 0.0
          %374 = vst.msk [vmem:[#allocation2 + $0x8] sm:$0xff] %vm372, 0.0
        $region44: #{tpu_custom_call.1} parent=35 // pred_fallthru
          _
        %v375 = vld [vmem:[%s343] sm:$0xff]
        %v376 = vld [vmem:[%s343 + $0x8] sm:$0xff]
        %v377 = vld [vmem:[%s281] sm:$0xff]
        %v378 = vld [vmem:[%s281 + $0x8] sm:$0xff]
        %v379 = vld [vmem:[%s357] sm:$0xff]
        %v380 = vld [vmem:[%s357 + $0x8] sm:$0xff]
        %v381 = vld [vmem:[%s366] sm:$0x1]
        %382 = vmatprep.subr.mxu0 0.0
        %v383 = vand.u32 %v377, 4294901760
        %384 = vmatpush1.xpose.msra.mxu0 %v383
        %385 = vmatprep.subr.mxu0 0.0
        %v386 = vand.u32 %v378, 4294901760
        %387 = vmatpush1.xpose.msra.mxu0 %v386
        %388 = vmatprep.subr.mxu0 0.0
        %389 = vmatpush1.xpose.msra.mxu0 0.0
        %390 = vmatprep.subr.mxu0 0.0
        %391 = vmatpush1.xpose.msra.mxu0 0.0
        %392 = vmatprep.subr.mxu0 0.0
        %393 = vmatpush1.xpose.msra.mxu0 0.0
        %394 = vmatprep.subr.mxu0 0.0
        %395 = vmatpush1.xpose.msra.mxu0 0.0
        %396 = vmatprep.subr.mxu0 0.0
        %397 = vmatpush1.xpose.msra.mxu0 0.0
        %398 = vmatprep.subr.mxu0 0.0
        %399 = vmatpush1.xpose.msra.mxu0 0.0
        %400 = vmatprep.subr.mxu0 0.0
        %401 = vmatpush1.xpose.msra.mxu0 0.0
        %402 = vmatprep.subr.mxu0 0.0
        %403 = vmatpush1.xpose.msra.mxu0 0.0
        %404 = vmatprep.subr.mxu0 0.0
        %405 = vmatpush1.xpose.msra.mxu0 0.0
        %406 = vmatprep.subr.mxu0 0.0
        %407 = vmatpush1.xpose.msra.mxu0 0.0
        %408 = vmatprep.subr.mxu0 0.0
        %409 = vmatpush1.xpose.msra.mxu0 0.0
        %410 = vmatprep.subr.mxu0 0.0
        %411 = vmatpush1.xpose.msra.mxu0 0.0
        %412 = vmatprep.subr.mxu0 0.0
        %413 = vmatpush1.xpose.msra.mxu0 0.0
        %414 = vmatprep.subr.mxu0 0.0
        %415 = vmatpush1.xpose.msra.mxu0 0.0
        %416 = vmatprep.subr.mxu0 0.0
        %417 = vmatpush1.xpose.msra.mxu0 0.0
        %418 = vmatprep.subr.mxu0 0.0
        %419 = vmatpush1.xpose.msra.mxu0 0.0
        %420 = vmatprep.subr.mxu0 0.0
        %421 = vmatpush1.xpose.msra.mxu0 0.0
        %422 = vmatprep.subr.mxu0 0.0
        %423 = vmatpush1.xpose.msra.mxu0 0.0
        %424 = vmatprep.subr.mxu0 0.0
        %425 = vmatpush1.xpose.msra.mxu0 0.0
        %426 = vmatprep.subr.mxu0 0.0
        %427 = vmatpush1.xpose.msra.mxu0 0.0
        %428 = vmatprep.subr.mxu0 0.0
        %429 = vmatpush1.xpose.msra.mxu0 0.0
        %430 = vmatprep.subr.mxu0 0.0
        %431 = vmatpush1.xpose.msra.mxu0 0.0
        %432 = vmatprep.subr.mxu0 0.0
        %433 = vmatpush1.xpose.msra.mxu0 0.0
        %434 = vmatprep.subr.mxu0 0.0
        %435 = vmatpush1.xpose.msra.mxu0 0.0
        %436 = vmatprep.subr.mxu0 0.0
        %437 = vmatpush1.xpose.msra.mxu0 0.0
        %438 = vmatprep.subr.mxu0 0.0
        %439 = vmatpush1.xpose.msra.mxu0 0.0
        %440 = vmatprep.subr.mxu0 0.0
        %441 = vmatpush1.xpose.msra.mxu0 0.0
        %442 = vmatprep.subr.mxu0 0.0
        %443 = vmatpush1.xpose.msra.mxu0 0.0
        %444 = vmatprep.subr.mxu0 0.0
        %445 = vmatpush1.xpose.msra.mxu0 0.0
        %446 = vmatprep.subr.mxu0 0.0
        %447 = vmatpush1.xpose.msra.mxu0 0.0
        %448 = vmatprep.mubr.f32.mxu0 0.0
        %v449 = vand.u32 %v375, 4294901760
        %v450 = vsub.f32 %v375, %v449
        %v451 = vand.u32 %v450, 4294901760
        %v452 = vsub.f32 %v450, %v451
        %v453 = vand.u32 %v452, 4294901760
        %454 = vmatmul.mubr.f32.gmra.mrb[0].mxu0 %v453
        %v455 = vpop.f32.mrb[0].mxu0
        %v456 = vadd.f32 0.0, %v455
        %v457 = vpop.f32.mrb[0].mxu0
        %458 = vmatprep.mubr.f32.mxu0 0.0
        %v459 = vand.u32 %v376, 4294901760
        %v460 = vsub.f32 %v376, %v459
        %v461 = vand.u32 %v460, 4294901760
        %v462 = vsub.f32 %v460, %v461
        %v463 = vand.u32 %v462, 4294901760
        %464 = vmatmul.mubr.f32.gmra.mrb[0].mxu0 %v463
        %v465 = vpop.f32.mrb[0].mxu0
        %v466 = vadd.f32 0.0, %v465
        %v467 = vpop.f32.mrb[0].mxu0
        %468 = vdwg.mxu0
        %469 = vmatprep.subr.mxu0 0.0
        %v470 = vand.u32 %v377, 4294901760
        %v471 = vsub.f32 %v377, %v470
        %v472 = vand.u32 %v471, 4294901760
        %v473 = vsub.f32 %v471, %v472
        %v474 = vand.u32 %v473, 4294901760
        %475 = vmatpush1.xpose.msra.mxu0 %v474
        %476 = vmatprep.subr.mxu0 0.0
        %v477 = vand.u32 %v378, 4294901760
        %v478 = vsub.f32 %v378, %v477
        %v479 = vand.u32 %v478, 4294901760
        %v480 = vsub.f32 %v478, %v479
        %v481 = vand.u32 %v480, 4294901760
        %482 = vmatpush1.xpose.msra.mxu0 %v481
        %483 = vmatprep.subr.mxu0 0.0
        %484 = vmatpush1.xpose.msra.mxu0 0.0
        %485 = vmatprep.subr.mxu0 0.0
        %486 = vmatpush1.xpose.msra.mxu0 0.0
        %487 = vmatprep.subr.mxu0 0.0
        %488 = vmatpush1.xpose.msra.mxu0 0.0
        %489 = vmatprep.subr.mxu0 0.0
        %490 = vmatpush1.xpose.msra.mxu0 0.0
        %491 = vmatprep.subr.mxu0 0.0
        %492 = vmatpush1.xpose.msra.mxu0 0.0
        %493 = vmatprep.subr.mxu0 0.0
        %494 = vmatpush1.xpose.msra.mxu0 0.0
        %495 = vmatprep.subr.mxu0 0.0
        %496 = vmatpush1.xpose.msra.mxu0 0.0
        %497 = vmatprep.subr.mxu0 0.0
        %498 = vmatpush1.xpose.msra.mxu0 0.0
        %499 = vmatprep.subr.mxu0 0.0
        %500 = vmatpush1.xpose.msra.mxu0 0.0
        %501 = vmatprep.subr.mxu0 0.0
        %502 = vmatpush1.xpose.msra.mxu0 0.0
        %503 = vmatprep.subr.mxu0 0.0
        %504 = vmatpush1.xpose.msra.mxu0 0.0
        %505 = vmatprep.subr.mxu0 0.0
        %506 = vmatpush1.xpose.msra.mxu0 0.0
        %507 = vmatprep.subr.mxu0 0.0
        %508 = vmatpush1.xpose.msra.mxu0 0.0
        %509 = vmatprep.subr.mxu0 0.0
        %510 = vmatpush1.xpose.msra.mxu0 0.0
        %511 = vmatprep.subr.mxu0 0.0
        %512 = vmatpush1.xpose.msra.mxu0 0.0
        %513 = vmatprep.subr.mxu0 0.0
        %514 = vmatpush1.xpose.msra.mxu0 0.0
        %515 = vmatprep.subr.mxu0 0.0
        %516 = vmatpush1.xpose.msra.mxu0 0.0
        %517 = vmatprep.subr.mxu0 0.0
        %518 = vmatpush1.xpose.msra.mxu0 0.0
        %519 = vmatprep.subr.mxu0 0.0
        %520 = vmatpush1.xpose.msra.mxu0 0.0
        %521 = vmatprep.subr.mxu0 0.0
        %522 = vmatpush1.xpose.msra.mxu0 0.0
        %523 = vmatprep.subr.mxu0 0.0
        %524 = vmatpush1.xpose.msra.mxu0 0.0
        %525 = vmatprep.subr.mxu0 0.0
        %526 = vmatpush1.xpose.msra.mxu0 0.0
        %527 = vmatprep.subr.mxu0 0.0
        %528 = vmatpush1.xpose.msra.mxu0 0.0
        %529 = vmatprep.subr.mxu0 0.0
        %530 = vmatpush1.xpose.msra.mxu0 0.0
        %531 = vmatprep.subr.mxu0 0.0
        %532 = vmatpush1.xpose.msra.mxu0 0.0
        %533 = vmatprep.subr.mxu0 0.0
        %534 = vmatpush1.xpose.msra.mxu0 0.0
        %535 = vmatprep.subr.mxu0 0.0
        %536 = vmatpush1.xpose.msra.mxu0 0.0
        %537 = vmatprep.subr.mxu0 0.0
        %538 = vmatpush1.xpose.msra.mxu0 0.0
        %539 = vmatprep.subr.mxu0 0.0
        %540 = vmatpush1.xpose.msra.mxu0 0.0
        %541 = vmatprep.subr.mxu0 0.0
        %542 = vmatpush1.xpose.msra.mxu0 0.0
        %543 = vmatprep.mubr.f32.mxu0 0.0
        %v544 = vand.u32 %v375, 4294901760
        %545 = vmatmul.mubr.f32.gmra.mrb[0].mxu0 %v544
        %v546 = vpop.f32.mrb[0].mxu0
        %v547 = vadd.f32 %v456, %v546
        %v548 = vpop.f32.mrb[0].mxu0
        %549 = vmatprep.mubr.f32.mxu0 0.0
        %v550 = vand.u32 %v376, 4294901760
        %551 = vmatmul.mubr.f32.gmra.mrb[0].mxu0 %v550
        %v552 = vpop.f32.mrb[0].mxu0
        %v553 = vadd.f32 %v466, %v552
        %v554 = vpop.f32.mrb[0].mxu0
        %555 = vdwg.mxu0
        %556 = vmatprep.subr.mxu0 0.0
        %v557 = vand.u32 %v377, 4294901760
        %v558 = vsub.f32 %v377, %v557
        %559 = vmatpush1.xpose.msra.mxu0 %v558
        %560 = vmatprep.subr.mxu0 0.0
        %v561 = vand.u32 %v378, 4294901760
        %v562 = vsub.f32 %v378, %v561
        %563 = vmatpush1.xpose.msra.mxu0 %v562
        %564 = vmatprep.subr.mxu0 0.0
        %565 = vmatpush1.xpose.msra.mxu0 0.0
        %566 = vmatprep.subr.mxu0 0.0
        %567 = vmatpush1.xpose.msra.mxu0 0.0
        %568 = vmatprep.subr.mxu0 0.0
        %569 = vmatpush1.xpose.msra.mxu0 0.0
        %570 = vmatprep.subr.mxu0 0.0
        %571 = vmatpush1.xpose.msra.mxu0 0.0
        %572 = vmatprep.subr.mxu0 0.0
        %573 = vmatpush1.xpose.msra.mxu0 0.0
        %574 = vmatprep.subr.mxu0 0.0
        %575 = vmatpush1.xpose.msra.mxu0 0.0
        %576 = vmatprep.subr.mxu0 0.0
        %577 = vmatpush1.xpose.msra.mxu0 0.0
        %578 = vmatprep.subr.mxu0 0.0
        %579 = vmatpush1.xpose.msra.mxu0 0.0
        %580 = vmatprep.subr.mxu0 0.0
        %581 = vmatpush1.xpose.msra.mxu0 0.0
        %582 = vmatprep.subr.mxu0 0.0
        %583 = vmatpush1.xpose.msra.mxu0 0.0
        %584 = vmatprep.subr.mxu0 0.0
        %585 = vmatpush1.xpose.msra.mxu0 0.0
        %586 = vmatprep.subr.mxu0 0.0
        %587 = vmatpush1.xpose.msra.mxu0 0.0
        %588 = vmatprep.subr.mxu0 0.0
        %589 = vmatpush1.xpose.msra.mxu0 0.0
        %590 = vmatprep.subr.mxu0 0.0
        %591 = vmatpush1.xpose.msra.mxu0 0.0
        %592 = vmatprep.subr.mxu0 0.0
        %593 = vmatpush1.xpose.msra.mxu0 0.0
        %594 = vmatprep.subr.mxu0 0.0
        %595 = vmatpush1.xpose.msra.mxu0 0.0
        %596 = vmatprep.subr.mxu0 0.0
        %597 = vmatpush1.xpose.msra.mxu0 0.0
        %598 = vmatprep.subr.mxu0 0.0
        %599 = vmatpush1.xpose.msra.mxu0 0.0
        %600 = vmatprep.subr.mxu0 0.0
        %601 = vmatpush1.xpose.msra.mxu0 0.0
        %602 = vmatprep.subr.mxu0 0.0
        %603 = vmatpush1.xpose.msra.mxu0 0.0
        %604 = vmatprep.subr.mxu0 0.0
        %605 = vmatpush1.xpose.msra.mxu0 0.0
        %606 = vmatprep.subr.mxu0 0.0
        %607 = vmatpush1.xpose.msra.mxu0 0.0
        %608 = vmatprep.subr.mxu0 0.0
        %609 = vmatpush1.xpose.msra.mxu0 0.0
        %610 = vmatprep.subr.mxu0 0.0
        %611 = vmatpush1.xpose.msra.mxu0 0.0
        %612 = vmatprep.subr.mxu0 0.0
        %613 = vmatpush1.xpose.msra.mxu0 0.0
        %614 = vmatprep.subr.mxu0 0.0
        %615 = vmatpush1.xpose.msra.mxu0 0.0
        %616 = vmatprep.subr.mxu0 0.0
        %617 = vmatpush1.xpose.msra.mxu0 0.0
        %618 = vmatprep.subr.mxu0 0.0
        %619 = vmatpush1.xpose.msra.mxu0 0.0
        %620 = vmatprep.subr.mxu0 0.0
        %621 = vmatpush1.xpose.msra.mxu0 0.0
        %622 = vmatprep.subr.mxu0 0.0
        %623 = vmatpush1.xpose.msra.mxu0 0.0
        %624 = vmatprep.mubr.f32.mxu0 0.0
        %v625 = vand.u32 %v375, 4294901760
        %v626 = vsub.f32 %v375, %v625
        %627 = vmatmul.mubr.f32.gmra.mrb[0].mxu0 %v626
        %v628 = vpop.f32.mrb[0].mxu0
        %v629 = vadd.f32 %v547, %v628
        %v630 = vpop.f32.mrb[0].mxu0
        %631 = vmatprep.mubr.f32.mxu0 0.0
        %v632 = vand.u32 %v376, 4294901760
        %v633 = vsub.f32 %v376, %v632
        %634 = vmatmul.mubr.f32.gmra.mrb[0].mxu0 %v633
        %v635 = vpop.f32.mrb[0].mxu0
        %v636 = vadd.f32 %v553, %v635
        %v637 = vpop.f32.mrb[0].mxu0
        %638 = vdwg.mxu0
        %639 = vmatprep.subr.mxu0 0.0
        %v640 = vand.u32 %v377, 4294901760
        %641 = vmatpush1.xpose.msra.mxu0 %v640
        %642 = vmatprep.subr.mxu0 0.0
        %v643 = vand.u32 %v378, 4294901760
        %644 = vmatpush1.xpose.msra.mxu0 %v643
        %645 = vmatprep.subr.mxu0 0.0
        %646 = vmatpush1.xpose.msra.mxu0 0.0
        %647 = vmatprep.subr.mxu0 0.0
        %648 = vmatpush1.xpose.msra.mxu0 0.0
        %649 = vmatprep.subr.mxu0 0.0
        %650 = vmatpush1.xpose.msra.mxu0 0.0
        %651 = vmatprep.subr.mxu0 0.0
        %652 = vmatpush1.xpose.msra.mxu0 0.0
        %653 = vmatprep.subr.mxu0 0.0
        %654 = vmatpush1.xpose.msra.mxu0 0.0
        %655 = vmatprep.subr.mxu0 0.0
        %656 = vmatpush1.xpose.msra.mxu0 0.0
        %657 = vmatprep.subr.mxu0 0.0
        %658 = vmatpush1.xpose.msra.mxu0 0.0
        %659 = vmatprep.subr.mxu0 0.0
        %660 = vmatpush1.xpose.msra.mxu0 0.0
        %661 = vmatprep.subr.mxu0 0.0
        %662 = vmatpush1.xpose.msra.mxu0 0.0
        %663 = vmatprep.subr.mxu0 0.0
        %664 = vmatpush1.xpose.msra.mxu0 0.0
        %665 = vmatprep.subr.mxu0 0.0
        %666 = vmatpush1.xpose.msra.mxu0 0.0
        %667 = vmatprep.subr.mxu0 0.0
        %668 = vmatpush1.xpose.msra.mxu0 0.0
        %669 = vmatprep.subr.mxu0 0.0
        %670 = vmatpush1.xpose.msra.mxu0 0.0
        %671 = vmatprep.subr.mxu0 0.0
        %672 = vmatpush1.xpose.msra.mxu0 0.0
        %673 = vmatprep.subr.mxu0 0.0
        %674 = vmatpush1.xpose.msra.mxu0 0.0
        %675 = vmatprep.subr.mxu0 0.0
        %676 = vmatpush1.xpose.msra.mxu0 0.0
        %677 = vmatprep.subr.mxu0 0.0
        %678 = vmatpush1.xpose.msra.mxu0 0.0
        %679 = vmatprep.subr.mxu0 0.0
        %680 = vmatpush1.xpose.msra.mxu0 0.0
        %681 = vmatprep.subr.mxu0 0.0
        %682 = vmatpush1.xpose.msra.mxu0 0.0
        %683 = vmatprep.subr.mxu0 0.0
        %684 = vmatpush1.xpose.msra.mxu0 0.0
        %685 = vmatprep.subr.mxu0 0.0
        %686 = vmatpush1.xpose.msra.mxu0 0.0
        %687 = vmatprep.subr.mxu0 0.0
        %688 = vmatpush1.xpose.msra.mxu0 0.0
        %689 = vmatprep.subr.mxu0 0.0
        %690 = vmatpush1.xpose.msra.mxu0 0.0
        %691 = vmatprep.subr.mxu0 0.0
        %692 = vmatpush1.xpose.msra.mxu0 0.0
        %693 = vmatprep.subr.mxu0 0.0
        %694 = vmatpush1.xpose.msra.mxu0 0.0
        %695 = vmatprep.subr.mxu0 0.0
        %696 = vmatpush1.xpose.msra.mxu0 0.0
        %697 = vmatprep.subr.mxu0 0.0
        %698 = vmatpush1.xpose.msra.mxu0 0.0
        %699 = vmatprep.subr.mxu0 0.0
        %700 = vmatpush1.xpose.msra.mxu0 0.0
        %701 = vmatprep.subr.mxu0 0.0
        %702 = vmatpush1.xpose.msra.mxu0 0.0
        %703 = vmatprep.subr.mxu0 0.0
        %704 = vmatpush1.xpose.msra.mxu0 0.0
        %705 = vmatprep.mubr.f32.mxu0 0.0
        %v706 = vand.u32 %v375, 4294901760
        %v707 = vsub.f32 %v375, %v706
        %v708 = vand.u32 %v707, 4294901760
        %709 = vmatmul.mubr.f32.gmra.mrb[0].mxu0 %v708
        %v710 = vpop.f32.mrb[0].mxu0
        %v711 = vadd.f32 %v629, %v710
        %v712 = vpop.f32.mrb[0].mxu0
        %713 = vmatprep.mubr.f32.mxu0 0.0
        %v714 = vand.u32 %v376, 4294901760
        %v715 = vsub.f32 %v376, %v714
        %v716 = vand.u32 %v715, 4294901760
        %717 = vmatmul.mubr.f32.gmra.mrb[0].mxu0 %v716
        %v718 = vpop.f32.mrb[0].mxu0
        %v719 = vadd.f32 %v636, %v718
        %v720 = vpop.f32.mrb[0].mxu0
        %721 = vdwg.mxu0
        %722 = vmatprep.subr.mxu0 0.0
        %v723 = vand.u32 %v377, 4294901760
        %v724 = vsub.f32 %v377, %v723
        %v725 = vand.u32 %v724, 4294901760
        %726 = vmatpush1.xpose.msra.mxu0 %v725
        %727 = vmatprep.subr.mxu0 0.0
        %v728 = vand.u32 %v378, 4294901760
        %v729 = vsub.f32 %v378, %v728
        %v730 = vand.u32 %v729, 4294901760
        %731 = vmatpush1.xpose.msra.mxu0 %v730
        %732 = vmatprep.subr.mxu0 0.0
        %733 = vmatpush1.xpose.msra.mxu0 0.0
        %734 = vmatprep.subr.mxu0 0.0
        %735 = vmatpush1.xpose.msra.mxu0 0.0
        %736 = vmatprep.subr.mxu0 0.0
        %737 = vmatpush1.xpose.msra.mxu0 0.0
        %738 = vmatprep.subr.mxu0 0.0
        %739 = vmatpush1.xpose.msra.mxu0 0.0
        %740 = vmatprep.subr.mxu0 0.0
        %741 = vmatpush1.xpose.msra.mxu0 0.0
        %742 = vmatprep.subr.mxu0 0.0
        %743 = vmatpush1.xpose.msra.mxu0 0.0
        %744 = vmatprep.subr.mxu0 0.0
        %745 = vmatpush1.xpose.msra.mxu0 0.0
        %746 = vmatprep.subr.mxu0 0.0
        %747 = vmatpush1.xpose.msra.mxu0 0.0
        %748 = vmatprep.subr.mxu0 0.0
        %749 = vmatpush1.xpose.msra.mxu0 0.0
        %750 = vmatprep.subr.mxu0 0.0
        %751 = vmatpush1.xpose.msra.mxu0 0.0
        %752 = vmatprep.subr.mxu0 0.0
        %753 = vmatpush1.xpose.msra.mxu0 0.0
        %754 = vmatprep.subr.mxu0 0.0
        %755 = vmatpush1.xpose.msra.mxu0 0.0
        %756 = vmatprep.subr.mxu0 0.0
        %757 = vmatpush1.xpose.msra.mxu0 0.0
        %758 = vmatprep.subr.mxu0 0.0
        %759 = vmatpush1.xpose.msra.mxu0 0.0
        %760 = vmatprep.subr.mxu0 0.0
        %761 = vmatpush1.xpose.msra.mxu0 0.0
        %762 = vmatprep.subr.mxu0 0.0
        %763 = vmatpush1.xpose.msra.mxu0 0.0
        %764 = vmatprep.subr.mxu0 0.0
        %765 = vmatpush1.xpose.msra.mxu0 0.0
        %766 = vmatprep.subr.mxu0 0.0
        %767 = vmatpush1.xpose.msra.mxu0 0.0
        %768 = vmatprep.subr.mxu0 0.0
        %769 = vmatpush1.xpose.msra.mxu0 0.0
        %770 = vmatprep.subr.mxu0 0.0
        %771 = vmatpush1.xpose.msra.mxu0 0.0
        %772 = vmatprep.subr.mxu0 0.0
        %773 = vmatpush1.xpose.msra.mxu0 0.0
        %774 = vmatprep.subr.mxu0 0.0
        %775 = vmatpush1.xpose.msra.mxu0 0.0
        %776 = vmatprep.subr.mxu0 0.0
        %777 = vmatpush1.xpose.msra.mxu0 0.0
        %778 = vmatprep.subr.mxu0 0.0
        %779 = vmatpush1.xpose.msra.mxu0 0.0
        %780 = vmatprep.subr.mxu0 0.0
        %781 = vmatpush1.xpose.msra.mxu0 0.0
        %782 = vmatprep.subr.mxu0 0.0
        %783 = vmatpush1.xpose.msra.mxu0 0.0
        %784 = vmatprep.subr.mxu0 0.0
        %785 = vmatpush1.xpose.msra.mxu0 0.0
        %786 = vmatprep.subr.mxu0 0.0
        %787 = vmatpush1.xpose.msra.mxu0 0.0
        %788 = vmatprep.subr.mxu0 0.0
        %789 = vmatpush1.xpose.msra.mxu0 0.0
        %790 = vmatprep.subr.mxu0 0.0
        %791 = vmatpush1.xpose.msra.mxu0 0.0
        %792 = vmatprep.mubr.f32.mxu0 0.0
        %v793 = vand.u32 %v375, 4294901760
        %794 = vmatmul.mubr.f32.gmra.mrb[0].mxu0 %v793
        %v795 = vpop.f32.mrb[0].mxu0
        %v796 = vadd.f32 %v711, %v795
        %v797 = vpop.f32.mrb[0].mxu0
        %798 = vmatprep.mubr.f32.mxu0 0.0
        %v799 = vand.u32 %v376, 4294901760
        %800 = vmatmul.mubr.f32.gmra.mrb[0].mxu0 %v799
        %v801 = vpop.f32.mrb[0].mxu0
        %v802 = vadd.f32 %v719, %v801
        %v803 = vpop.f32.mrb[0].mxu0
        %804 = vdwg.mxu0
        %805 = vmatprep.subr.mxu0 0.0
        %v806 = vand.u32 %v377, 4294901760
        %807 = vmatpush1.xpose.msra.mxu0 %v806
        %808 = vmatprep.subr.mxu0 0.0
        %v809 = vand.u32 %v378, 4294901760
        %810 = vmatpush1.xpose.msra.mxu0 %v809
        %811 = vmatprep.subr.mxu0 0.0
        %812 = vmatpush1.xpose.msra.mxu0 0.0
        %813 = vmatprep.subr.mxu0 0.0
        %814 = vmatpush1.xpose.msra.mxu0 0.0
        %815 = vmatprep.subr.mxu0 0.0
        %816 = vmatpush1.xpose.msra.mxu0 0.0
        %817 = vmatprep.subr.mxu0 0.0
        %818 = vmatpush1.xpose.msra.mxu0 0.0
        %819 = vmatprep.subr.mxu0 0.0
        %820 = vmatpush1.xpose.msra.mxu0 0.0
        %821 = vmatprep.subr.mxu0 0.0
        %822 = vmatpush1.xpose.msra.mxu0 0.0
        %823 = vmatprep.subr.mxu0 0.0
        %824 = vmatpush1.xpose.msra.mxu0 0.0
        %825 = vmatprep.subr.mxu0 0.0
        %826 = vmatpush1.xpose.msra.mxu0 0.0
        %827 = vmatprep.subr.mxu0 0.0
        %828 = vmatpush1.xpose.msra.mxu0 0.0
        %829 = vmatprep.subr.mxu0 0.0
        %830 = vmatpush1.xpose.msra.mxu0 0.0
        %831 = vmatprep.subr.mxu0 0.0
        %832 = vmatpush1.xpose.msra.mxu0 0.0
        %833 = vmatprep.subr.mxu0 0.0
        %834 = vmatpush1.xpose.msra.mxu0 0.0
        %835 = vmatprep.subr.mxu0 0.0
        %836 = vmatpush1.xpose.msra.mxu0 0.0
        %837 = vmatprep.subr.mxu0 0.0
        %838 = vmatpush1.xpose.msra.mxu0 0.0
        %839 = vmatprep.subr.mxu0 0.0
        %840 = vmatpush1.xpose.msra.mxu0 0.0
        %841 = vmatprep.subr.mxu0 0.0
        %842 = vmatpush1.xpose.msra.mxu0 0.0
        %843 = vmatprep.subr.mxu0 0.0
        %844 = vmatpush1.xpose.msra.mxu0 0.0
        %845 = vmatprep.subr.mxu0 0.0
        %846 = vmatpush1.xpose.msra.mxu0 0.0
        %847 = vmatprep.subr.mxu0 0.0
        %848 = vmatpush1.xpose.msra.mxu0 0.0
        %849 = vmatprep.subr.mxu0 0.0
        %850 = vmatpush1.xpose.msra.mxu0 0.0
        %851 = vmatprep.subr.mxu0 0.0
        %852 = vmatpush1.xpose.msra.mxu0 0.0
        %853 = vmatprep.subr.mxu0 0.0
        %854 = vmatpush1.xpose.msra.mxu0 0.0
        %855 = vmatprep.subr.mxu0 0.0
        %856 = vmatpush1.xpose.msra.mxu0 0.0
        %857 = vmatprep.subr.mxu0 0.0
        %858 = vmatpush1.xpose.msra.mxu0 0.0
        %859 = vmatprep.subr.mxu0 0.0
        %860 = vmatpush1.xpose.msra.mxu0 0.0
        %861 = vmatprep.subr.mxu0 0.0
        %862 = vmatpush1.xpose.msra.mxu0 0.0
        %863 = vmatprep.subr.mxu0 0.0
        %864 = vmatpush1.xpose.msra.mxu0 0.0
        %865 = vmatprep.subr.mxu0 0.0
        %866 = vmatpush1.xpose.msra.mxu0 0.0
        %867 = vmatprep.subr.mxu0 0.0
        %868 = vmatpush1.xpose.msra.mxu0 0.0
        %869 = vmatprep.subr.mxu0 0.0
        %870 = vmatpush1.xpose.msra.mxu0 0.0
        %871 = vmatprep.mubr.f32.mxu0 0.0
        %v872 = vand.u32 %v375, 4294901760
        %873 = vmatmul.mubr.f32.gmra.mrb[0].mxu0 %v872
        %v874 = vpop.f32.mrb[0].mxu0
        %v875 = vadd.f32 %v796, %v874
        %v876 = vpop.f32.mrb[0].mxu0
        %877 = vmatprep.mubr.f32.mxu0 0.0
        %v878 = vand.u32 %v376, 4294901760
        %879 = vmatmul.mubr.f32.gmra.mrb[0].mxu0 %v878
        %v880 = vpop.f32.mrb[0].mxu0
        %v881 = vadd.f32 %v802, %v880
        %v882 = vpop.f32.mrb[0].mxu0
        %883 = vdwg.mxu0
        %885 = vset.pattern.permute.xlu0 0
        %886 = vperm.xlu0 %885, %v379
        %v887 = vpop.permute.xlu0 %886
        %890 = vset.pattern.permute.xlu0 0
        %891 = vperm.xlu0 %890, %v380
        %v892 = vpop.permute.xlu0 %891
        %v895 = vlaneseq
        %v896 = vshrl.u32 %v895, 7
        %v897 = vsub.s32 0, %v896
        %v898 = vrot.slane %v381, %v897
        %v900 = vadd.f32 %v887, %v898
        %v901 = vadd.f32 %v892, %v898
        %v902 = vmul.f32 %v875, 2.0
        %v903 = vmul.f32 %v881, 2.0
        %v904 = vsub.f32 %v900, %v902
        %v905 = vsub.f32 %v901, %v903
        %v906 = vmax.f32 %v904, 0.0
        %v907 = vmax.f32 %v905, 0.0
        %v908 = vmul.f32 %v906, -2.0
        %v909 = vmul.f32 %v907, -2.0
        %v910 = vmul.f32 %v908, 1.442695
        %v911 = vpow.pop %v910
        %v912 = vmul.f32 %v909, 1.442695
        %v913 = vpow.pop %v912
        %s914 = sld [smem:[#allocation4 + %s38]]
        %s915 = sld [smem:[#allocation5 + %s38]]
        %p916 = scmp.eq.s32.totalorder %s914, %s915
        %p917 = scmp.ne.s32.totalorder %s914, %s915
        // Predicated region
        $region45: #{tpu_custom_call.1} parent=35 // pred_check
          %p918 = pneg %p917
        $region46: #{tpu_custom_call.1} parent=35 // pred_check_branch
          %920 = sbr.rel (%p918) target = $region48
        $region47: #{tpu_custom_call.1} parent=35 // pred_region
          %v921 = vld [vmem:[#allocation2] sm:$0xff]
          %v922 = vld [vmem:[#allocation2 + $0x8] sm:$0xff]
          %v923 = vmul.f32 %v911, 2.0
          %v924 = vmul.f32 %v913, 2.0
          %v925 = vadd.f32 %v921, %v923
          %v926 = vadd.f32 %v922, %v924
          %vm927 = vcmask 130048
          %928 = vst.msk [vmem:[#allocation2] sm:$0xff] %vm927, %v925
          %929 = vst.msk [vmem:[#allocation2 + $0x8] sm:$0xff] %vm927, %v926
        $region48: #{tpu_custom_call.1} parent=35 // pred_fallthru
          _
        // Predicated region
        $region49: #{tpu_custom_call.1} parent=35 // pred_check
          %p930 = pneg %p916
        $region50: #{tpu_custom_call.1} parent=35 // pred_check_branch
          %932 = sbr.rel (%p930) target = $region52
        $region51: #{tpu_custom_call.1} parent=35 // pred_region
          %v933 = vlaneseq
          %v934 = vshrl.u32 %v933, 7
          %v935 = vadd.s32 %v934, 8
          %v936 = vlaneseq
          %v937 = vand.u32 %v936, 127
          %v938 = vld [vmem:[#allocation2] sm:$0xff]
          %v939 = vld [vmem:[#allocation2 + $0x8] sm:$0xff]
          %vm940 = vcmp.eq.s32.totalorder %v934, %v937
          %vm941 = vcmp.eq.s32.totalorder %v935, %v937
          %v942 = vsel %vm940, 0.0, %v911
          %v943 = vsel %vm941, 0.0, %v913
          %v944 = vadd.f32 %v938, %v942
          %v945 = vadd.f32 %v939, %v943
          %vm946 = vcmask 130048
          %947 = vst.msk [vmem:[#allocation2] sm:$0xff] %vm946, %v944
          %948 = vst.msk [vmem:[#allocation2 + $0x8] sm:$0xff] %vm946, %v945
        $region52: #{tpu_custom_call.1} parent=35 // pred_fallthru
          _
        %p949 = scmp.eq.s32.totalorder %s38, 5
        // Predicated region
        $region53: #{tpu_custom_call.1} parent=35 // pred_check
          %p950 = pneg %p949
        $region54: #{tpu_custom_call.1} parent=35 // pred_check_branch
          %952 = sbr.rel (%p950) target = $region56
        $region55: #{tpu_custom_call.1} parent=35 // pred_region
          %v953 = vld [vmem:[#allocation2] sm:$0xff]
          %v954 = vld [vmem:[#allocation2 + $0x8] sm:$0xff]
          %vm955 = vcmask 130048
          %v956 = vsel %vm955, %v953, 0.0
          %v957 = vsel %vm955, %v954, 0.0
          %v958 = vadd.f32 %v956, %v957
          %959 = vadd.xlane.f32.xlu0 %v958
          %v960 = vpop.xlane.xlu0 %959
          %v961 = vrot.slane %v960, 4
          %v962 = vadd.f32 %v960, %v961
          %v963 = vrot.slane %v962, 2
          %v964 = vadd.f32 %v962, %v963
          %v965 = vrot.slane %v964, 1
          %v966 = vadd.f32 %v964, %v965
          %s967 = vtos %v966
          %s968 = smul.f32 %s967, 0.0005285412
          %v969 = vstv %s968
          %v970 = vlog2.pop %v969
          %v971 = vmul.f32 %v970, 0.6931472
          %s972 = vtos %v971
          %v973 = vstv %s972
          %974 = vst [vmem:[%s333] sm:$0xff] %v973
        $region56: #{tpu_custom_call.1} parent=35 // pred_fallthru
          _
        %s975 = sand.u32 %s173, 1
        %s976 = scalar_lea.sflag [#allocation8], %s975
        %s977 = sand.u32 %s173, 1
        %s978 = smul.addr %s977, 8
        %s979 = scalar_lea.vmem [#allocation9], %s978
        // Predicated region
        $region57: #{tpu_custom_call.1} parent=35 // pred_check
          %p980 = pneg %p183
        $region58: #{tpu_custom_call.1} parent=35 // pred_check_branch
          %982 = sbr.rel (%p980) target = $region60
        $region59: #{tpu_custom_call.1} parent=35 // pred_region
          %s984 = ssub.s32 128, 128
          %985 = vsyncadd %s976, %s984
          %s986 = smul.addr %s37, 128
          %s987 = scalar_lea.hbm %s6, %s986
          %s989 = sshll.u32 %s979, 4
          %s990 = int_to_ptr.vmem [resolvable:$true] %s989
          %992 = dma.vmem_to_hbm [thread:$0]  %s990, 128, %s987, %s976
        $region60: #{tpu_custom_call.1} parent=35 // pred_fallthru
          _
      $region36: #{tpu_custom_call.1} parent=5 // pred_fallthru
        _
      %p993 = scmp.le.s32.totalorder 2, %s28
      // Predicated region
      $region61: #{tpu_custom_call.1} parent=5 // pred_check
        %p994 = pneg %p993
      $region62: #{tpu_custom_call.1} parent=5 // pred_check_branch
        %996 = sbr.rel (%p994) target = $region64
      $region63: #{tpu_custom_call.1} parent=5 // pred_region
        %s997 = ssub.s32 %s28, 2
        // Predicated region
        $region65: #{tpu_custom_call.1} parent=63 // pred_check
          %p998 = pneg %p189
        $region66: #{tpu_custom_call.1} parent=63 // pred_check_branch
          %1000 = sbr.rel (%p998) target = $region68
        $region67: #{tpu_custom_call.1} parent=63 // pred_region
          %s1001 = sand.u32 %s174, 1
          %s1002 = scalar_lea.sflag [#allocation8], %s1001
          %s1003 = sand.u32 %s174, 1
          %s1004 = smul.addr %s1003, 8
          %s1005 = scalar_lea.vmem [#allocation9], %s1004
          %1006 = dma.done %s1002, 128
        $region68: #{tpu_custom_call.1} parent=63 // pred_fallthru
          _
      $region64: #{tpu_custom_call.1} parent=5 // pred_fallthru
        _
    $region6: #{tpu_custom_call.1} parent=1 // loop_footer
      %s32 = sadd.s32 1, %s28
    $region7: #{tpu_custom_call.1} parent=1 // loop_footer_branch
      %27 = sbr.rel target = $region3
    $region8: #{tpu_custom_call.1} parent=1 // loop_exit
      _
    %1007 = vsyncpa [#allocation7], 1
    %s1008 = scalar_lea.sflag [#allocation7], 1
    %1009 = vsyncpa %s1008, 1
    %1010 = vsyncpa [#allocation8], 1
    %s1011 = scalar_lea.sflag [#allocation8], 1
    %1012 = vsyncpa %s1011, 1

</llo_original>
